<compile_context>
chip_gen: v7x
topology: tpu7x:2x2x1
jax: 0.10.0
libtpu: 0.0.40
codegen_flags: <defaults>
</compile_context>

<pallas_src>
import jax
import jax.numpy as jnp
from jax import lax
from jax.experimental import pallas as pl
from jax.experimental.pallas import tpu as pltpu

C_IN = 2      # in_channels after cat([T0, T2], dim=1)
C_OUT = 32    # conv out channels
EMBED = 64    # embed_dim
K = 3         # conv kernel size (padding=1)
RDIM = 64     # padded im2col reduction dim: 54 taps + 1 bias row + 9 zero rows


def trend_kernel(patch_ref, cw_ref, fw_ref, fb_ref, out_ref):
    # patch_ref: (NB, RDIM, DHW) im2col patches (+ ones row for conv bias)
    # cw_ref:    (C_OUT, RDIM)   flattened conv weights (+ bias in column 54)
    # fw_ref:    (C_OUT, EMBED)  fc weight transposed (torch fc.weight.T)
    # fb_ref:    (1, EMBED)      fc bias
    # out_ref:   (NB, EMBED)
    NB, _, DHW = patch_ref.shape
    inv_dhw = 1.0 / float(DHW)

    cw = cw_ref[...]           # hoisted single load
    fw = fw_ref[...]           # hoisted single load

    rows = []
    for b in range(NB):        # NB <= 8, static unroll
        # Conv3d as a single MXU matmul -> lane-dense (C_OUT, DHW) result.
        conv = jnp.dot(cw, patch_ref[b], preferred_element_type=jnp.float32)
        conv = jnp.maximum(conv, 0.0)                       # ReLU (bias folded in)
        # AdaptiveAvgPool3d((1,1,1)): mean over spatial (lane reduce on XLU).
        pooled = jnp.sum(conv, axis=1, keepdims=True) * inv_dhw   # (C_OUT, 1)
        # Linear(32 -> EMBED) for this row without relayouting the channel axis:
        # (C_OUT,1)*(C_OUT,EMBED) -> sublane reduce -> (1, EMBED).
        rows.append(jnp.sum(pooled * fw, axis=0, keepdims=True))
    out = jnp.concatenate(rows, axis=0) + fb_ref[...]       # (NB, EMBED)
    out_ref[...] = out.astype(out_ref.dtype)


def trend_extractor(T0, T2, conv_w, conv_b, fc_w, fc_b, nb_max=8):
    """T0, T2: (B, 1, D, H, W).  conv_w: PyTorch (C_OUT, C_IN, K, K, K).
    fc_w: PyTorch layout (EMBED, C_OUT).  Returns (B, EMBED)."""
    x = jnp.concatenate([T0, T2], axis=1).astype(jnp.float32)   # (B, C_IN, D, H, W)
    B, Cin, D, H, W = x.shape
    DHW = D * H * W
    xpad = jnp.pad(x, ((0, 0), (0, 0), (1, 1), (1, 1), (1, 1)))

    # im2col (layout plumbing only): row r = ((ci*K+kd)*K+kh)*K+kw for r < 54,
    # row 54 = ones (carries the conv bias through the matmul), rest zero-pad.
    rows = []
    for ci in range(Cin):
        for kd in range(K):
            for kh in range(K):
                for kw in range(K):
                    rows.append(
                        xpad[:, ci, kd:kd + D, kh:kh + H, kw:kw + W].reshape(B, DHW))
    rows.append(jnp.ones((B, DHW), jnp.float32))                # bias row (index 54)
    patches = jnp.stack(rows, axis=1)                           # (B, 55, DHW)
    n_rows = patches.shape[1]
    patches = jnp.pad(patches, ((0, 0), (0, RDIM - n_rows), (0, 0)))  # (B, RDIM, DHW)

    # Conv weights flattened the same way; conv bias goes into column 54.
    cw = conv_w.reshape(C_OUT, Cin * K * K * K).astype(jnp.float32)
    cw_aug = jnp.zeros((C_OUT, RDIM), jnp.float32)
    cw_aug = cw_aug.at[:, :cw.shape[1]].set(cw)
    cw_aug = cw_aug.at[:, cw.shape[1]].set(conv_b.astype(jnp.float32))

    fw_t = fc_w.astype(jnp.float32).T                           # (C_OUT, EMBED)
    fb2 = fc_b.astype(jnp.float32).reshape(1, EMBED)

    # NB batch elements per grid step; pad B so the grid divides evenly.
    NB = min(B, nb_max)
    B_pad = ((B + NB - 1) // NB) * NB
    if B_pad != B:
        patches = jnp.pad(patches, ((0, B_pad - B), (0, 0), (0, 0)))

    out = pl.pallas_call(
        trend_kernel,
        out_shape=jax.ShapeDtypeStruct((B_pad, EMBED), jnp.float32),
        grid_spec=pltpu.PrefetchScalarGridSpec(
            num_scalar_prefetch=0,
            grid=(B_pad // NB,),
            in_specs=[
                pl.BlockSpec((NB, RDIM, DHW), lambda g: (g, 0, 0)),
                pl.BlockSpec((C_OUT, RDIM), lambda g: (0, 0)),
                pl.BlockSpec((C_OUT, EMBED), lambda g: (0, 0)),
                pl.BlockSpec((1, EMBED), lambda g: (0, 0)),
            ],
            out_specs=pl.BlockSpec((NB, EMBED), lambda g: (g, 0)),
        ),
        compiler_params=pltpu.CompilerParams(
            dimension_semantics=("parallel",)),   # v7x: shard batch over 2 TCs
    )(patches, cw_aug, fw_t, fb2)
    return out[:B]


def reference(T0, T2, conv_w, conv_b, fc_w, fc_b):
    """Pure-JAX reference matching the PyTorch module semantics."""
    x = jnp.concatenate([T0, T2], axis=1)
    y = lax.conv_general_dilated(
        x, conv_w, window_strides=(1, 1, 1),
        padding=((1, 1), (1, 1), (1, 1)),
        dimension_numbers=("NCDHW", "OIDHW", "NCDHW"),
        precision=lax.Precision.HIGHEST)
    y = jnp.maximum(y + conv_b.reshape(1, -1, 1, 1, 1), 0.0)
    feat = jnp.mean(y, axis=(2, 3, 4))                          # (B, 32)
    return feat @ fc_w.T + fc_b                                 # (B, EMBED)


if __name__ == "__main__":
    key = jax.random.PRNGKey(0)
    k1, k2, k3, k4, k5, k6 = jax.random.split(key, 6)

    B, D, H, W = 2, 8, 8, 8
    T0 = jax.random.normal(k1, (B, 1, D, H, W), jnp.float32)
    T2 = jax.random.normal(k2, (B, 1, D, H, W), jnp.float32)

    # Deterministic synthetic parameters (shapes match the nn.Module).
    conv_w = jax.random.normal(k3, (C_OUT, C_IN, K, K, K), jnp.float32) * 0.1
    conv_b = jax.random.normal(k4, (C_OUT,), jnp.float32) * 0.1
    fc_w = jax.random.normal(k5, (EMBED, C_OUT), jnp.float32) * 0.1   # torch fc.weight
    fc_b = jax.random.normal(k6, (EMBED,), jnp.float32) * 0.1

    run = jax.jit(trend_extractor)
    out = jax.block_until_ready(run(T0, T2, conv_w, conv_b, fc_w, fc_b))

    ref = reference(T0, T2, conv_w, conv_b, fc_w, fc_b)
    assert out.shape == (B, EMBED)
    max_err = float(jnp.max(jnp.abs(out - ref)))
    if max_err > 1e-3:
        raise AssertionError(f"Pallas output mismatch vs reference: {max_err}")
    print("KERNEL_OK")
</pallas_src>

<mosaic_0001>
module attributes {stable_mosaic.version = 11 : i64} {
  func.func @trend_kernel(%arg0: i32, %arg1: memref<2x64x512xf32, #tpu.memory_space<vmem>>, %arg2: memref<32x64xf32, #tpu.memory_space<vmem>>, %arg3: memref<32x64xf32, #tpu.memory_space<vmem>>, %arg4: memref<1x64xf32, #tpu.memory_space<vmem>>, %arg5: memref<2x64xf32, #tpu.memory_space<vmem>>) attributes {dimension_semantics = [#tpu.dimension_semantics<parallel>], iteration_bounds = array<i64: 1>, scalar_prefetch = 0 : i64, scratch_operands = 0 : i64, tpu.core_type = #tpu.core_type<tc>, window_params = [{transform_indices = @transform_0, window_bounds = array<i64: 2, 64, 512>}, {pipeline_mode = #tpu.pipeline_mode<synchronous>, transform_indices = @transform_1, window_bounds = array<i64: 32, 64>}, {pipeline_mode = #tpu.pipeline_mode<synchronous>, transform_indices = @transform_2, window_bounds = array<i64: 32, 64>}, {pipeline_mode = #tpu.pipeline_mode<synchronous>, transform_indices = @transform_3, window_bounds = array<i64: 1, 64>}, {transform_indices = @transform_4, window_bounds = array<i64: 2, 64>}]} {
    %c0 = arith.constant 0 : index
    %c0_0 = arith.constant 0 : index
    %0 = vector.load %arg2[%c0, %c0_0] : memref<32x64xf32, #tpu.memory_space<vmem>>, vector<32x64xf32>
    %c0_1 = arith.constant 0 : index
    %c0_2 = arith.constant 0 : index
    %1 = vector.load %arg3[%c0_1, %c0_2] : memref<32x64xf32, #tpu.memory_space<vmem>>, vector<32x64xf32>
    %c0_3 = arith.constant 0 : index
    %c0_4 = arith.constant 0 : index
    %c0_5 = arith.constant 0 : index
    %2 = vector.load %arg1[%c0_3, %c0_4, %c0_5] : memref<2x64x512xf32, #tpu.memory_space<vmem>>, vector<1x64x512xf32>
    %3 = vector.shape_cast %2 : vector<1x64x512xf32> to vector<64x512xf32>
    %cst = arith.constant dense<0.000000e+00> : vector<32x512xf32>
    %4 = tpu.matmul %0, %3, %cst {dimension_numbers = #tpu.dot_dimension_numbers<[1], [0], [0], [1], [0, 0, 1, 1], [], []>} : vector<32x64xf32>, vector<64x512xf32>, vector<32x512xf32> -> vector<32x512xf32>
    %cst_6 = arith.constant 0.000000e+00 : f32
    %5 = vector.broadcast %cst_6 : f32 to vector<32x512xf32>
    %6 = arith.maximumf %4, %5 : vector<32x512xf32>
    %cst_7 = arith.constant dense<0.000000e+00> : vector<32xf32>
    %7 = vector.multi_reduction <add>, %6, %cst_7 [1] : vector<32x512xf32> to vector<32xf32>
    %8 = vector.shape_cast %7 : vector<32xf32> to vector<32x1xf32>
    %cst_8 = arith.constant 0.001953125 : f32
    %9 = vector.broadcast %cst_8 : f32 to vector<32x1xf32>
    %10 = arith.mulf %8, %9 : vector<32x1xf32>
    %11 = vector.broadcast %10 : vector<32x1xf32> to vector<32x64xf32>
    %12 = arith.mulf %11, %1 : vector<32x64xf32>
    %cst_9 = arith.constant dense<0.000000e+00> : vector<64xf32>
    %13 = vector.multi_reduction <add>, %12, %cst_9 [0] : vector<32x64xf32> to vector<64xf32>
    %14 = vector.shape_cast %13 : vector<64xf32> to vector<1x64xf32>
    %c1 = arith.constant 1 : index
    %c0_10 = arith.constant 0 : index
    %c0_11 = arith.constant 0 : index
    %15 = vector.load %arg1[%c1, %c0_10, %c0_11] : memref<2x64x512xf32, #tpu.memory_space<vmem>>, vector<1x64x512xf32>
    %16 = vector.shape_cast %15 : vector<1x64x512xf32> to vector<64x512xf32>
    %cst_12 = arith.constant dense<0.000000e+00> : vector<32x512xf32>
    %17 = tpu.matmul %0, %16, %cst_12 {dimension_numbers = #tpu.dot_dimension_numbers<[1], [0], [0], [1], [0, 0, 1, 1], [], []>} : vector<32x64xf32>, vector<64x512xf32>, vector<32x512xf32> -> vector<32x512xf32>
    %cst_13 = arith.constant 0.000000e+00 : f32
    %18 = vector.broadcast %cst_13 : f32 to vector<32x512xf32>
    %19 = arith.maximumf %17, %18 : vector<32x512xf32>
    %cst_14 = arith.constant dense<0.000000e+00> : vector<32xf32>
    %20 = vector.multi_reduction <add>, %19, %cst_14 [1] : vector<32x512xf32> to vector<32xf32>
    %21 = vector.shape_cast %20 : vector<32xf32> to vector<32x1xf32>
    %cst_15 = arith.constant 0.001953125 : f32
    %22 = vector.broadcast %cst_15 : f32 to vector<32x1xf32>
    %23 = arith.mulf %21, %22 : vector<32x1xf32>
    %24 = vector.broadcast %23 : vector<32x1xf32> to vector<32x64xf32>
    %25 = arith.mulf %24, %1 : vector<32x64xf32>
    %cst_16 = arith.constant dense<0.000000e+00> : vector<64xf32>
    %26 = vector.multi_reduction <add>, %25, %cst_16 [0] : vector<32x64xf32> to vector<64xf32>
    %27 = vector.shape_cast %26 : vector<64xf32> to vector<1x64xf32>
    %28 = tpu.concatenate %14, %27 in 0 : vector<1x64xf32>, vector<1x64xf32> -> vector<2x64xf32>
    %c0_17 = arith.constant 0 : index
    %c0_18 = arith.constant 0 : index
    %29 = vector.load %arg4[%c0_17, %c0_18] : memref<1x64xf32, #tpu.memory_space<vmem>>, vector<1x64xf32>
    %30 = vector.broadcast %29 : vector<1x64xf32> to vector<2x64xf32>
    %31 = arith.addf %28, %30 : vector<2x64xf32>
    %c0_19 = arith.constant 0 : index
    %c0_20 = arith.constant 0 : index
    %32 = vector.load %arg5[%c0_19, %c0_20] : memref<2x64xf32, #tpu.memory_space<vmem>>, vector<2x64xf32>
    tpu.vector_store %arg5[%c0_19, %c0_20], %31 {strides = array<i32>} : memref<2x64xf32, #tpu.memory_space<vmem>>, vector<2x64xf32>,
    return
  }
  func.func @transform_0(%arg0: i32) -> (i32, i32, i32) {
    %c0_i32 = arith.constant 0 : i32
    %c0_i32_0 = arith.constant 0 : i32
    %c0_i32_1 = arith.constant 0 : i32
    return %arg0, %c0_i32, %c0_i32_0 : i32, i32, i32
  }
  func.func @transform_1(%arg0: i32) -> (i32, i32) {
    %c0_i32 = arith.constant 0 : i32
    %c0_i32_0 = arith.constant 0 : i32
    %c0_i32_1 = arith.constant 0 : i32
    return %c0_i32, %c0_i32_0 : i32, i32
  }
  func.func @transform_2(%arg0: i32) -> (i32, i32) {
    %c0_i32 = arith.constant 0 : i32
    %c0_i32_0 = arith.constant 0 : i32
    %c0_i32_1 = arith.constant 0 : i32
    return %c0_i32, %c0_i32_0 : i32, i32
  }
  func.func @transform_3(%arg0: i32) -> (i32, i32) {
    %c0_i32 = arith.constant 0 : i32
    %c0_i32_0 = arith.constant 0 : i32
    %c0_i32_1 = arith.constant 0 : i32
    return %c0_i32, %c0_i32_0 : i32, i32
  }
  func.func @transform_4(%arg0: i32) -> (i32, i32) {
    %c0_i32 = arith.constant 0 : i32
    %c0_i32_0 = arith.constant 0 : i32
    return %arg0, %c0_i32 : i32, i32
  }
}

</mosaic_0001>

<llo_original>
// kernel: squeeze.67
$region0: #{squeeze.67}
  %s0 = inlined_call_operand.hbm [shape: f32[2,1,8,8,8], index: 0, kind: input, shape index: {}]
  %s1 = inlined_call_operand.vmem [shape: f32[2,1,512], index: 1, kind: output, shape index: {}]
  $region1: #{squeeze.67} parent=0
    #allocation0 [shape = 'u8[65536]{0}', space=vmem, size = 0x10000, scoped, tag = 'operand span for operand 0']
    #allocation1 [shape = 's32[1]{0}', space=sflag, size = 0x4, scoped, tag = 'scoped memory for squeeze.67']
    #allocation2 [shape = 'u8[32768]{0}', space=vmem, size = 0x8000, scoped, tag = 'scoped mem for output reshape']
    %2 = vsyncpa [#allocation1], 0
    %s4 = ssub.s32 2048, 2048
    %5 = vsyncadd [#allocation1], %s4
    %s7 = sshll.u32 [#allocation0], 4
    %s8 = int_to_ptr.vmem [resolvable:$true] %s7
    %10 = dma.hbm_to_vmem [thread:$0]  %s0, 2048, %s8, [#allocation1]
    %11 = dma.done [#allocation1], 2048
    %s12 = smov 3
    %v13 = vld [vmem:[#allocation0] ss:$16 sm:%s12]
    %s14 = smov 12
    %v15 = vld [vmem:[#allocation0] ss:$16 sm:%s14]
    %vm16 = vcmask 1043458
    %v17 = vsel %vm16, %v15, %v13
    %s18 = smov 48
    %v19 = vld [vmem:[#allocation0] ss:$16 sm:%s18]
    %vm20 = vcmask 1045508
    %v21 = vsel %vm20, %v19, %v17
    %s22 = smov 192
    %v23 = vld [vmem:[#allocation0] ss:$16 sm:%s22]
    %vm24 = vcmask 1047558
    %v25 = vsel %vm24, %v23, %v21
    %vm26 = vcmask 64512
    %27 = vst.msk [vmem:[#allocation2] ss:$8 sm:$0xf] %vm26, %v25
    %28 = vst.msk [vmem:[#allocation2] ss:$8 sm:$0xf0] %vm26, %v25
    %s29 = scalar_lea.vmem [#allocation0], 15
    %s30 = smov 3
    %v31 = vld [vmem:[%s29] ss:$16 sm:%s30]
    %s32 = scalar_lea.vmem [#allocation0], 15
    %s33 = smov 12
    %v34 = vld [vmem:[%s32] ss:$16 sm:%s33]
    %vm35 = vcmask 1043458
    %v36 = vsel %vm35, %v34, %v31
    %s37 = scalar_lea.vmem [#allocation0], 15
    %s38 = smov 48
    %v39 = vld [vmem:[%s37] ss:$16 sm:%s38]
    %vm40 = vcmask 1045508
    %v41 = vsel %vm40, %v39, %v36
    %s42 = scalar_lea.vmem [#allocation0], 15
    %s43 = smov 192
    %v44 = vld [vmem:[%s42] ss:$16 sm:%s43]
    %vm45 = vcmask 1047558
    %v46 = vsel %vm45, %v44, %v41
    %47 = vrot.lane.b32.xlu0 %v46, 120
    %v48 = vpop.permute.xlu0 %47
    %vm49 = vcmask 1048512
    %50 = vst.msk [vmem:[#allocation2] ss:$8 sm:$0xf] %vm49, %v48
    %51 = vst.msk [vmem:[#allocation2] ss:$8 sm:$0xf0] %vm49, %v48
    %s52 = scalar_lea.vmem [#allocation0], 14
    %s53 = smov 3
    %v54 = vld [vmem:[%s52] ss:$16 sm:%s53]
    %s55 = scalar_lea.vmem [#allocation0], 14
    %s56 = smov 12
    %v57 = vld [vmem:[%s55] ss:$16 sm:%s56]
    %vm58 = vcmask 1043458
    %v59 = vsel %vm58, %v57, %v54
    %s60 = scalar_lea.vmem [#allocation0], 14
    %s61 = smov 48
    %v62 = vld [vmem:[%s60] ss:$16 sm:%s61]
    %vm63 = vcmask 1045508
    %v64 = vsel %vm63, %v62, %v59
    %s65 = scalar_lea.vmem [#allocation0], 14
    %s66 = smov 192
    %v67 = vld [vmem:[%s65] ss:$16 sm:%s66]
    %vm68 = vcmask 1047558
    %v69 = vsel %vm68, %v67, %v64
    %70 = vrot.lane.b32.xlu0 %v69, 112
    %v71 = vpop.permute.xlu0 %70
    %vm72 = vcmask 982912
    %73 = vst.msk [vmem:[#allocation2] ss:$8 sm:$0xf] %vm72, %v71
    %74 = vst.msk [vmem:[#allocation2] ss:$8 sm:$0xf0] %vm72, %v71
    %s75 = scalar_lea.vmem [#allocation0], 13
    %s76 = smov 3
    %v77 = vld [vmem:[%s75] ss:$16 sm:%s76]
    %s78 = scalar_lea.vmem [#allocation0], 13
    %s79 = smov 12
    %v80 = vld [vmem:[%s78] ss:$16 sm:%s79]
    %vm81 = vcmask 1043458
    %v82 = vsel %vm81, %v80, %v77
    %s83 = scalar_lea.vmem [#allocation0], 13
    %s84 = smov 48
    %v85 = vld [vmem:[%s83] ss:$16 sm:%s84]
    %vm86 = vcmask 1045508
    %v87 = vsel %vm86, %v85, %v82
    %s88 = scalar_lea.vmem [#allocation0], 13
    %s89 = smov 192
    %v90 = vld [vmem:[%s88] ss:$16 sm:%s89]
    %vm91 = vcmask 1047558
    %v92 = vsel %vm91, %v90, %v87
    %93 = vrot.lane.b32.xlu0 %v92, 104
    %v94 = vpop.permute.xlu0 %93
    %vm95 = vcmask 917312
    %96 = vst.msk [vmem:[#allocation2] ss:$8 sm:$0xf] %vm95, %v94
    %97 = vst.msk [vmem:[#allocation2] ss:$8 sm:$0xf0] %vm95, %v94
    %s98 = scalar_lea.vmem [#allocation0], 12
    %s99 = smov 3
    %v100 = vld [vmem:[%s98] ss:$16 sm:%s99]
    %s101 = scalar_lea.vmem [#allocation0], 12
    %s102 = smov 12
    %v103 = vld [vmem:[%s101] ss:$16 sm:%s102]
    %vm104 = vcmask 1043458
    %v105 = vsel %vm104, %v103, %v100
    %s106 = scalar_lea.vmem [#allocation0], 12
    %s107 = smov 48
    %v108 = vld [vmem:[%s106] ss:$16 sm:%s107]
    %vm109 = vcmask 1045508
    %v110 = vsel %vm109, %v108, %v105
    %s111 = scalar_lea.vmem [#allocation0], 12
    %s112 = smov 192
    %v113 = vld [vmem:[%s111] ss:$16 sm:%s112]
    %vm114 = vcmask 1047558
    %v115 = vsel %vm114, %v113, %v110
    %116 = vrot.lane.b32.xlu0 %v115, 96
    %v117 = vpop.permute.xlu0 %116
    %vm118 = vcmask 851712
    %119 = vst.msk [vmem:[#allocation2] ss:$8 sm:$0xf] %vm118, %v117
    %120 = vst.msk [vmem:[#allocation2] ss:$8 sm:$0xf0] %vm118, %v117
    %s121 = scalar_lea.vmem [#allocation0], 11
    %s122 = smov 3
    %v123 = vld [vmem:[%s121] ss:$16 sm:%s122]
    %s124 = scalar_lea.vmem [#allocation0], 11
    %s125 = smov 12
    %v126 = vld [vmem:[%s124] ss:$16 sm:%s125]
    %vm127 = vcmask 1043458
    %v128 = vsel %vm127, %v126, %v123
    %s129 = scalar_lea.vmem [#allocation0], 11
    %s130 = smov 48
    %v131 = vld [vmem:[%s129] ss:$16 sm:%s130]
    %vm132 = vcmask 1045508
    %v133 = vsel %vm132, %v131, %v128
    %s134 = scalar_lea.vmem [#allocation0], 11
    %s135 = smov 192
    %v136 = vld [vmem:[%s134] ss:$16 sm:%s135]
    %vm137 = vcmask 1047558
    %v138 = vsel %vm137, %v136, %v133
    %139 = vrot.lane.b32.xlu0 %v138, 88
    %v140 = vpop.permute.xlu0 %139
    %vm141 = vcmask 786112
    %142 = vst.msk [vmem:[#allocation2] ss:$8 sm:$0xf] %vm141, %v140
    %143 = vst.msk [vmem:[#allocation2] ss:$8 sm:$0xf0] %vm141, %v140
    %s144 = scalar_lea.vmem [#allocation0], 10
    %s145 = smov 3
    %v146 = vld [vmem:[%s144] ss:$16 sm:%s145]
    %s147 = scalar_lea.vmem [#allocation0], 10
    %s148 = smov 12
    %v149 = vld [vmem:[%s147] ss:$16 sm:%s148]
    %vm150 = vcmask 1043458
    %v151 = vsel %vm150, %v149, %v146
    %s152 = scalar_lea.vmem [#allocation0], 10
    %s153 = smov 48
    %v154 = vld [vmem:[%s152] ss:$16 sm:%s153]
    %vm155 = vcmask 1045508
    %v156 = vsel %vm155, %v154, %v151
    %s157 = scalar_lea.vmem [#allocation0], 10
    %s158 = smov 192
    %v159 = vld [vmem:[%s157] ss:$16 sm:%s158]
    %vm160 = vcmask 1047558
    %v161 = vsel %vm160, %v159, %v156
    %162 = vrot.lane.b32.xlu0 %v161, 80
    %v163 = vpop.permute.xlu0 %162
    %vm164 = vcmask 720512
    %165 = vst.msk [vmem:[#allocation2] ss:$8 sm:$0xf] %vm164, %v163
    %166 = vst.msk [vmem:[#allocation2] ss:$8 sm:$0xf0] %vm164, %v163
    %s167 = scalar_lea.vmem [#allocation0], 9
    %s168 = smov 3
    %v169 = vld [vmem:[%s167] ss:$16 sm:%s168]
    %s170 = scalar_lea.vmem [#allocation0], 9
    %s171 = smov 12
    %v172 = vld [vmem:[%s170] ss:$16 sm:%s171]
    %vm173 = vcmask 1043458
    %v174 = vsel %vm173, %v172, %v169
    %s175 = scalar_lea.vmem [#allocation0], 9
    %s176 = smov 48
    %v177 = vld [vmem:[%s175] ss:$16 sm:%s176]
    %vm178 = vcmask 1045508
    %v179 = vsel %vm178, %v177, %v174
    %s180 = scalar_lea.vmem [#allocation0], 9
    %s181 = smov 192
    %v182 = vld [vmem:[%s180] ss:$16 sm:%s181]
    %vm183 = vcmask 1047558
    %v184 = vsel %vm183, %v182, %v179
    %185 = vrot.lane.b32.xlu0 %v184, 72
    %v186 = vpop.permute.xlu0 %185
    %vm187 = vcmask 654912
    %188 = vst.msk [vmem:[#allocation2] ss:$8 sm:$0xf] %vm187, %v186
    %189 = vst.msk [vmem:[#allocation2] ss:$8 sm:$0xf0] %vm187, %v186
    %s190 = scalar_lea.vmem [#allocation0], 8
    %s191 = smov 3
    %v192 = vld [vmem:[%s190] ss:$16 sm:%s191]
    %s193 = scalar_lea.vmem [#allocation0], 8
    %s194 = smov 12
    %v195 = vld [vmem:[%s193] ss:$16 sm:%s194]
    %vm196 = vcmask 1043458
    %v197 = vsel %vm196, %v195, %v192
    %s198 = scalar_lea.vmem [#allocation0], 8
    %s199 = smov 48
    %v200 = vld [vmem:[%s198] ss:$16 sm:%s199]
    %vm201 = vcmask 1045508
    %v202 = vsel %vm201, %v200, %v197
    %s203 = scalar_lea.vmem [#allocation0], 8
    %s204 = smov 192
    %v205 = vld [vmem:[%s203] ss:$16 sm:%s204]
    %vm206 = vcmask 1047558
    %v207 = vsel %vm206, %v205, %v202
    %208 = vrot.lane.b32.xlu0 %v207, 64
    %v209 = vpop.permute.xlu0 %208
    %vm210 = vcmask 589312
    %211 = vst.msk [vmem:[#allocation2] ss:$8 sm:$0xf] %vm210, %v209
    %212 = vst.msk [vmem:[#allocation2] ss:$8 sm:$0xf0] %vm210, %v209
    %s213 = scalar_lea.vmem [#allocation0], 7
    %s214 = smov 3
    %v215 = vld [vmem:[%s213] ss:$16 sm:%s214]
    %s216 = scalar_lea.vmem [#allocation0], 7
    %s217 = smov 12
    %v218 = vld [vmem:[%s216] ss:$16 sm:%s217]
    %vm219 = vcmask 1043458
    %v220 = vsel %vm219, %v218, %v215
    %s221 = scalar_lea.vmem [#allocation0], 7
    %s222 = smov 48
    %v223 = vld [vmem:[%s221] ss:$16 sm:%s222]
    %vm224 = vcmask 1045508
    %v225 = vsel %vm224, %v223, %v220
    %s226 = scalar_lea.vmem [#allocation0], 7
    %s227 = smov 192
    %v228 = vld [vmem:[%s226] ss:$16 sm:%s227]
    %vm229 = vcmask 1047558
    %v230 = vsel %vm229, %v228, %v225
    %231 = vrot.lane.b32.xlu0 %v230, 56
    %v232 = vpop.permute.xlu0 %231
    %vm233 = vcmask 523712
    %234 = vst.msk [vmem:[#allocation2] ss:$8 sm:$0xf] %vm233, %v232
    %235 = vst.msk [vmem:[#allocation2] ss:$8 sm:$0xf0] %vm233, %v232
    %s236 = scalar_lea.vmem [#allocation0], 6
    %s237 = smov 3
    %v238 = vld [vmem:[%s236] ss:$16 sm:%s237]
    %s239 = scalar_lea.vmem [#allocation0], 6
    %s240 = smov 12
    %v241 = vld [vmem:[%s239] ss:$16 sm:%s240]
    %vm242 = vcmask 1043458
    %v243 = vsel %vm242, %v241, %v238
    %s244 = scalar_lea.vmem [#allocation0], 6
    %s245 = smov 48
    %v246 = vld [vmem:[%s244] ss:$16 sm:%s245]
    %vm247 = vcmask 1045508
    %v248 = vsel %vm247, %v246, %v243
    %s249 = scalar_lea.vmem [#allocation0], 6
    %s250 = smov 192
    %v251 = vld [vmem:[%s249] ss:$16 sm:%s250]
    %vm252 = vcmask 1047558
    %v253 = vsel %vm252, %v251, %v248
    %254 = vrot.lane.b32.xlu0 %v253, 48
    %v255 = vpop.permute.xlu0 %254
    %vm256 = vcmask 458112
    %257 = vst.msk [vmem:[#allocation2] ss:$8 sm:$0xf] %vm256, %v255
    %258 = vst.msk [vmem:[#allocation2] ss:$8 sm:$0xf0] %vm256, %v255
    %s259 = scalar_lea.vmem [#allocation0], 5
    %s260 = smov 3
    %v261 = vld [vmem:[%s259] ss:$16 sm:%s260]
    %s262 = scalar_lea.vmem [#allocation0], 5
    %s263 = smov 12
    %v264 = vld [vmem:[%s262] ss:$16 sm:%s263]
    %vm265 = vcmask 1043458
    %v266 = vsel %vm265, %v264, %v261
    %s267 = scalar_lea.vmem [#allocation0], 5
    %s268 = smov 48
    %v269 = vld [vmem:[%s267] ss:$16 sm:%s268]
    %vm270 = vcmask 1045508
    %v271 = vsel %vm270, %v269, %v266
    %s272 = scalar_lea.vmem [#allocation0], 5
    %s273 = smov 192
    %v274 = vld [vmem:[%s272] ss:$16 sm:%s273]
    %vm275 = vcmask 1047558
    %v276 = vsel %vm275, %v274, %v271
    %277 = vrot.lane.b32.xlu0 %v276, 40
    %v278 = vpop.permute.xlu0 %277
    %vm279 = vcmask 392512
    %280 = vst.msk [vmem:[#allocation2] ss:$8 sm:$0xf] %vm279, %v278
    %281 = vst.msk [vmem:[#allocation2] ss:$8 sm:$0xf0] %vm279, %v278
    %s282 = scalar_lea.vmem [#allocation0], 4
    %s283 = smov 3
    %v284 = vld [vmem:[%s282] ss:$16 sm:%s283]
    %s285 = scalar_lea.vmem [#allocation0], 4
    %s286 = smov 12
    %v287 = vld [vmem:[%s285] ss:$16 sm:%s286]
    %vm288 = vcmask 1043458
    %v289 = vsel %vm288, %v287, %v284
    %s290 = scalar_lea.vmem [#allocation0], 4
    %s291 = smov 48
    %v292 = vld [vmem:[%s290] ss:$16 sm:%s291]
    %vm293 = vcmask 1045508
    %v294 = vsel %vm293, %v292, %v289
    %s295 = scalar_lea.vmem [#allocation0], 4
    %s296 = smov 192
    %v297 = vld [vmem:[%s295] ss:$16 sm:%s296]
    %vm298 = vcmask 1047558
    %v299 = vsel %vm298, %v297, %v294
    %300 = vrot.lane.b32.xlu0 %v299, 32
    %v301 = vpop.permute.xlu0 %300
    %vm302 = vcmask 326912
    %303 = vst.msk [vmem:[#allocation2] ss:$8 sm:$0xf] %vm302, %v301
    %304 = vst.msk [vmem:[#allocation2] ss:$8 sm:$0xf0] %vm302, %v301
    %s305 = scalar_lea.vmem [#allocation0], 3
    %s306 = smov 3
    %v307 = vld [vmem:[%s305] ss:$16 sm:%s306]
    %s308 = scalar_lea.vmem [#allocation0], 3
    %s309 = smov 12
    %v310 = vld [vmem:[%s308] ss:$16 sm:%s309]
    %vm311 = vcmask 1043458
    %v312 = vsel %vm311, %v310, %v307
    %s313 = scalar_lea.vmem [#allocation0], 3
    %s314 = smov 48
    %v315 = vld [vmem:[%s313] ss:$16 sm:%s314]
    %vm316 = vcmask 1045508
    %v317 = vsel %vm316, %v315, %v312
    %s318 = scalar_lea.vmem [#allocation0], 3
    %s319 = smov 192
    %v320 = vld [vmem:[%s318] ss:$16 sm:%s319]
    %vm321 = vcmask 1047558
    %v322 = vsel %vm321, %v320, %v317
    %323 = vrot.lane.b32.xlu0 %v322, 24
    %v324 = vpop.permute.xlu0 %323
    %vm325 = vcmask 261312
    %326 = vst.msk [vmem:[#allocation2] ss:$8 sm:$0xf] %vm325, %v324
    %327 = vst.msk [vmem:[#allocation2] ss:$8 sm:$0xf0] %vm325, %v324
    %s328 = scalar_lea.vmem [#allocation0], 2
    %s329 = smov 3
    %v330 = vld [vmem:[%s328] ss:$16 sm:%s329]
    %s331 = scalar_lea.vmem [#allocation0], 2
    %s332 = smov 12
    %v333 = vld [vmem:[%s331] ss:$16 sm:%s332]
    %vm334 = vcmask 1043458
    %v335 = vsel %vm334, %v333, %v330
    %s336 = scalar_lea.vmem [#allocation0], 2
    %s337 = smov 48
    %v338 = vld [vmem:[%s336] ss:$16 sm:%s337]
    %vm339 = vcmask 1045508
    %v340 = vsel %vm339, %v338, %v335
    %s341 = scalar_lea.vmem [#allocation0], 2
    %s342 = smov 192
    %v343 = vld [vmem:[%s341] ss:$16 sm:%s342]
    %vm344 = vcmask 1047558
    %v345 = vsel %vm344, %v343, %v340
    %346 = vrot.lane.b32.xlu0 %v345, 16
    %v347 = vpop.permute.xlu0 %346
    %vm348 = vcmask 195712
    %349 = vst.msk [vmem:[#allocation2] ss:$8 sm:$0xf] %vm348, %v347
    %350 = vst.msk [vmem:[#allocation2] ss:$8 sm:$0xf0] %vm348, %v347
    %s351 = scalar_lea.vmem [#allocation0], 1
    %s352 = smov 3
    %v353 = vld [vmem:[%s351] ss:$16 sm:%s352]
    %s354 = scalar_lea.vmem [#allocation0], 1
    %s355 = smov 12
    %v356 = vld [vmem:[%s354] ss:$16 sm:%s355]
    %vm357 = vcmask 1043458
    %v358 = vsel %vm357, %v356, %v353
    %s359 = scalar_lea.vmem [#allocation0], 1
    %s360 = smov 48
    %v361 = vld [vmem:[%s359] ss:$16 sm:%s360]
    %vm362 = vcmask 1045508
    %v363 = vsel %vm362, %v361, %v358
    %s364 = scalar_lea.vmem [#allocation0], 1
    %s365 = smov 192
    %v366 = vld [vmem:[%s364] ss:$16 sm:%s365]
    %vm367 = vcmask 1047558
    %v368 = vsel %vm367, %v366, %v363
    %369 = vrot.lane.b32.xlu0 %v368, 8
    %v370 = vpop.permute.xlu0 %369
    %vm371 = vcmask 130112
    %372 = vst.msk [vmem:[#allocation2] ss:$8 sm:$0xf] %vm371, %v370
    %373 = vst.msk [vmem:[#allocation2] ss:$8 sm:$0xf0] %vm371, %v370
    %s375 = sshllo.u32 0, 1
    %v377 = vld [vmem:[#allocation2] sm:%s375]
    %s378 = sshllo.u32 0, 1
    %379 = vst [vmem:[%s1] sm:%s378] %v377
    %s380 = scalar_lea.vmem [#allocation2], 8
    %v381 = vld [vmem:[%s380] sm:%s375]
    %s382 = sshllo.u32 0, 1
    %s383 = scalar_lea.vmem %s1, 1
    %384 = vst [vmem:[%s383] sm:%s382] %v381
    %s385 = scalar_lea.vmem [#allocation2], 16
    %v386 = vld [vmem:[%s385] sm:%s375]
    %s387 = sshllo.u32 0, 1
    %s388 = smul.addr 1, 2
    %s389 = scalar_lea.vmem %s1, %s388
    %390 = vst [vmem:[%s389] sm:%s387] %v386
    %s391 = scalar_lea.vmem [#allocation2], 24
    %v392 = vld [vmem:[%s391] sm:%s375]
    %s393 = sshllo.u32 0, 1
    %s394 = smul.addr 1, 3
    %s395 = scalar_lea.vmem %s1, %s394
    %396 = vst [vmem:[%s395] sm:%s393] %v392
    %s397 = scalar_lea.vmem [#allocation2], 32
    %v398 = vld [vmem:[%s397] sm:%s375]
    %s399 = sshllo.u32 0, 1
    %s400 = smul.addr 1, 4
    %s401 = scalar_lea.vmem %s1, %s400
    %402 = vst [vmem:[%s401] sm:%s399] %v398
    %s403 = scalar_lea.vmem [#allocation2], 40
    %v404 = vld [vmem:[%s403] sm:%s375]
    %s405 = sshllo.u32 0, 1
    %s406 = smul.addr 1, 5
    %s407 = scalar_lea.vmem %s1, %s406
    %408 = vst [vmem:[%s407] sm:%s405] %v404
    %s409 = scalar_lea.vmem [#allocation2], 48
    %v410 = vld [vmem:[%s409] sm:%s375]
    %s411 = sshllo.u32 0, 1
    %s412 = smul.addr 1, 6
    %s413 = scalar_lea.vmem %s1, %s412
    %414 = vst [vmem:[%s413] sm:%s411] %v410
    %s415 = scalar_lea.vmem [#allocation2], 56
    %v416 = vld [vmem:[%s415] sm:%s375]
    %s417 = sshllo.u32 0, 1
    %s418 = smul.addr 1, 7
    %s419 = scalar_lea.vmem %s1, %s418
    %420 = vst [vmem:[%s419] sm:%s417] %v416
    %421 = vsyncpa [#allocation1], 1

// kernel: squeeze.94
$region0: #{squeeze.94}
  %s0 = inlined_call_operand.vmem [shape: f32[2,1,8,8,8], index: 0, kind: input, shape index: {}]
  %s1 = inlined_call_operand.vmem [shape: f32[2,1,512], index: 1, kind: output, shape index: {}]
  $region1: #{squeeze.94} parent=0
    #allocation0 [shape = 'u8[32768]{0}', space=vmem, size = 0x8000, scoped, tag = 'scoped mem for output reshape']
    %s2 = smov 3
    %v3 = vld [vmem:[%s0] ss:$16 sm:%s2]
    %s4 = smov 12
    %v5 = vld [vmem:[%s0] ss:$16 sm:%s4]
    %vm6 = vcmask 1043458
    %v7 = vsel %vm6, %v5, %v3
    %s8 = smov 48
    %v9 = vld [vmem:[%s0] ss:$16 sm:%s8]
    %vm10 = vcmask 1045508
    %v11 = vsel %vm10, %v9, %v7
    %s12 = smov 192
    %v13 = vld [vmem:[%s0] ss:$16 sm:%s12]
    %vm14 = vcmask 1047558
    %v15 = vsel %vm14, %v13, %v11
    %vm16 = vcmask 64512
    %17 = vst.msk [vmem:[#allocation0] ss:$8 sm:$0xf] %vm16, %v15
    %18 = vst.msk [vmem:[#allocation0] ss:$8 sm:$0xf0] %vm16, %v15
    %s19 = scalar_lea.vmem %s0, 15
    %s20 = smov 3
    %v21 = vld [vmem:[%s19] ss:$16 sm:%s20]
    %s22 = scalar_lea.vmem %s0, 15
    %s23 = smov 12
    %v24 = vld [vmem:[%s22] ss:$16 sm:%s23]
    %vm25 = vcmask 1043458
    %v26 = vsel %vm25, %v24, %v21
    %s27 = scalar_lea.vmem %s0, 15
    %s28 = smov 48
    %v29 = vld [vmem:[%s27] ss:$16 sm:%s28]
    %vm30 = vcmask 1045508
    %v31 = vsel %vm30, %v29, %v26
    %s32 = scalar_lea.vmem %s0, 15
    %s33 = smov 192
    %v34 = vld [vmem:[%s32] ss:$16 sm:%s33]
    %vm35 = vcmask 1047558
    %v36 = vsel %vm35, %v34, %v31
    %37 = vrot.lane.b32.xlu0 %v36, 120
    %v38 = vpop.permute.xlu0 %37
    %vm39 = vcmask 1048512
    %40 = vst.msk [vmem:[#allocation0] ss:$8 sm:$0xf] %vm39, %v38
    %41 = vst.msk [vmem:[#allocation0] ss:$8 sm:$0xf0] %vm39, %v38
    %s42 = scalar_lea.vmem %s0, 14
    %s43 = smov 3
    %v44 = vld [vmem:[%s42] ss:$16 sm:%s43]
    %s45 = scalar_lea.vmem %s0, 14
    %s46 = smov 12
    %v47 = vld [vmem:[%s45] ss:$16 sm:%s46]
    %vm48 = vcmask 1043458
    %v49 = vsel %vm48, %v47, %v44
    %s50 = scalar_lea.vmem %s0, 14
    %s51 = smov 48
    %v52 = vld [vmem:[%s50] ss:$16 sm:%s51]
    %vm53 = vcmask 1045508
    %v54 = vsel %vm53, %v52, %v49
    %s55 = scalar_lea.vmem %s0, 14
    %s56 = smov 192
    %v57 = vld [vmem:[%s55] ss:$16 sm:%s56]
    %vm58 = vcmask 1047558
    %v59 = vsel %vm58, %v57, %v54
    %60 = vrot.lane.b32.xlu0 %v59, 112
    %v61 = vpop.permute.xlu0 %60
    %vm62 = vcmask 982912
    %63 = vst.msk [vmem:[#allocation0] ss:$8 sm:$0xf] %vm62, %v61
    %64 = vst.msk [vmem:[#allocation0] ss:$8 sm:$0xf0] %vm62, %v61
    %s65 = scalar_lea.vmem %s0, 13
    %s66 = smov 3
    %v67 = vld [vmem:[%s65] ss:$16 sm:%s66]
    %s68 = scalar_lea.vmem %s0, 13
    %s69 = smov 12
    %v70 = vld [vmem:[%s68] ss:$16 sm:%s69]
    %vm71 = vcmask 1043458
    %v72 = vsel %vm71, %v70, %v67
    %s73 = scalar_lea.vmem %s0, 13
    %s74 = smov 48
    %v75 = vld [vmem:[%s73] ss:$16 sm:%s74]
    %vm76 = vcmask 1045508
    %v77 = vsel %vm76, %v75, %v72
    %s78 = scalar_lea.vmem %s0, 13
    %s79 = smov 192
    %v80 = vld [vmem:[%s78] ss:$16 sm:%s79]
    %vm81 = vcmask 1047558
    %v82 = vsel %vm81, %v80, %v77
    %83 = vrot.lane.b32.xlu0 %v82, 104
    %v84 = vpop.permute.xlu0 %83
    %vm85 = vcmask 917312
    %86 = vst.msk [vmem:[#allocation0] ss:$8 sm:$0xf] %vm85, %v84
    %87 = vst.msk [vmem:[#allocation0] ss:$8 sm:$0xf0] %vm85, %v84
    %s88 = scalar_lea.vmem %s0, 12
    %s89 = smov 3
    %v90 = vld [vmem:[%s88] ss:$16 sm:%s89]
    %s91 = scalar_lea.vmem %s0, 12
    %s92 = smov 12
    %v93 = vld [vmem:[%s91] ss:$16 sm:%s92]
    %vm94 = vcmask 1043458
    %v95 = vsel %vm94, %v93, %v90
    %s96 = scalar_lea.vmem %s0, 12
    %s97 = smov 48
    %v98 = vld [vmem:[%s96] ss:$16 sm:%s97]
    %vm99 = vcmask 1045508
    %v100 = vsel %vm99, %v98, %v95
    %s101 = scalar_lea.vmem %s0, 12
    %s102 = smov 192
    %v103 = vld [vmem:[%s101] ss:$16 sm:%s102]
    %vm104 = vcmask 1047558
    %v105 = vsel %vm104, %v103, %v100
    %106 = vrot.lane.b32.xlu0 %v105, 96
    %v107 = vpop.permute.xlu0 %106
    %vm108 = vcmask 851712
    %109 = vst.msk [vmem:[#allocation0] ss:$8 sm:$0xf] %vm108, %v107
    %110 = vst.msk [vmem:[#allocation0] ss:$8 sm:$0xf0] %vm108, %v107
    %s111 = scalar_lea.vmem %s0, 11
    %s112 = smov 3
    %v113 = vld [vmem:[%s111] ss:$16 sm:%s112]
    %s114 = scalar_lea.vmem %s0, 11
    %s115 = smov 12
    %v116 = vld [vmem:[%s114] ss:$16 sm:%s115]
    %vm117 = vcmask 1043458
    %v118 = vsel %vm117, %v116, %v113
    %s119 = scalar_lea.vmem %s0, 11
    %s120 = smov 48
    %v121 = vld [vmem:[%s119] ss:$16 sm:%s120]
    %vm122 = vcmask 1045508
    %v123 = vsel %vm122, %v121, %v118
    %s124 = scalar_lea.vmem %s0, 11
    %s125 = smov 192
    %v126 = vld [vmem:[%s124] ss:$16 sm:%s125]
    %vm127 = vcmask 1047558
    %v128 = vsel %vm127, %v126, %v123
    %129 = vrot.lane.b32.xlu0 %v128, 88
    %v130 = vpop.permute.xlu0 %129
    %vm131 = vcmask 786112
    %132 = vst.msk [vmem:[#allocation0] ss:$8 sm:$0xf] %vm131, %v130
    %133 = vst.msk [vmem:[#allocation0] ss:$8 sm:$0xf0] %vm131, %v130
    %s134 = scalar_lea.vmem %s0, 10
    %s135 = smov 3
    %v136 = vld [vmem:[%s134] ss:$16 sm:%s135]
    %s137 = scalar_lea.vmem %s0, 10
    %s138 = smov 12
    %v139 = vld [vmem:[%s137] ss:$16 sm:%s138]
    %vm140 = vcmask 1043458
    %v141 = vsel %vm140, %v139, %v136
    %s142 = scalar_lea.vmem %s0, 10
    %s143 = smov 48
    %v144 = vld [vmem:[%s142] ss:$16 sm:%s143]
    %vm145 = vcmask 1045508
    %v146 = vsel %vm145, %v144, %v141
    %s147 = scalar_lea.vmem %s0, 10
    %s148 = smov 192
    %v149 = vld [vmem:[%s147] ss:$16 sm:%s148]
    %vm150 = vcmask 1047558
    %v151 = vsel %vm150, %v149, %v146
    %152 = vrot.lane.b32.xlu0 %v151, 80
    %v153 = vpop.permute.xlu0 %152
    %vm154 = vcmask 720512
    %155 = vst.msk [vmem:[#allocation0] ss:$8 sm:$0xf] %vm154, %v153
    %156 = vst.msk [vmem:[#allocation0] ss:$8 sm:$0xf0] %vm154, %v153
    %s157 = scalar_lea.vmem %s0, 9
    %s158 = smov 3
    %v159 = vld [vmem:[%s157] ss:$16 sm:%s158]
    %s160 = scalar_lea.vmem %s0, 9
    %s161 = smov 12
    %v162 = vld [vmem:[%s160] ss:$16 sm:%s161]
    %vm163 = vcmask 1043458
    %v164 = vsel %vm163, %v162, %v159
    %s165 = scalar_lea.vmem %s0, 9
    %s166 = smov 48
    %v167 = vld [vmem:[%s165] ss:$16 sm:%s166]
    %vm168 = vcmask 1045508
    %v169 = vsel %vm168, %v167, %v164
    %s170 = scalar_lea.vmem %s0, 9
    %s171 = smov 192
    %v172 = vld [vmem:[%s170] ss:$16 sm:%s171]
    %vm173 = vcmask 1047558
    %v174 = vsel %vm173, %v172, %v169
    %175 = vrot.lane.b32.xlu0 %v174, 72
    %v176 = vpop.permute.xlu0 %175
    %vm177 = vcmask 654912
    %178 = vst.msk [vmem:[#allocation0] ss:$8 sm:$0xf] %vm177, %v176
    %179 = vst.msk [vmem:[#allocation0] ss:$8 sm:$0xf0] %vm177, %v176
    %s180 = scalar_lea.vmem %s0, 8
    %s181 = smov 3
    %v182 = vld [vmem:[%s180] ss:$16 sm:%s181]
    %s183 = scalar_lea.vmem %s0, 8
    %s184 = smov 12
    %v185 = vld [vmem:[%s183] ss:$16 sm:%s184]
    %vm186 = vcmask 1043458
    %v187 = vsel %vm186, %v185, %v182
    %s188 = scalar_lea.vmem %s0, 8
    %s189 = smov 48
    %v190 = vld [vmem:[%s188] ss:$16 sm:%s189]
    %vm191 = vcmask 1045508
    %v192 = vsel %vm191, %v190, %v187
    %s193 = scalar_lea.vmem %s0, 8
    %s194 = smov 192
    %v195 = vld [vmem:[%s193] ss:$16 sm:%s194]
    %vm196 = vcmask 1047558
    %v197 = vsel %vm196, %v195, %v192
    %198 = vrot.lane.b32.xlu0 %v197, 64
    %v199 = vpop.permute.xlu0 %198
    %vm200 = vcmask 589312
    %201 = vst.msk [vmem:[#allocation0] ss:$8 sm:$0xf] %vm200, %v199
    %202 = vst.msk [vmem:[#allocation0] ss:$8 sm:$0xf0] %vm200, %v199
    %s203 = scalar_lea.vmem %s0, 7
    %s204 = smov 3
    %v205 = vld [vmem:[%s203] ss:$16 sm:%s204]
    %s206 = scalar_lea.vmem %s0, 7
    %s207 = smov 12
    %v208 = vld [vmem:[%s206] ss:$16 sm:%s207]
    %vm209 = vcmask 1043458
    %v210 = vsel %vm209, %v208, %v205
    %s211 = scalar_lea.vmem %s0, 7
    %s212 = smov 48
    %v213 = vld [vmem:[%s211] ss:$16 sm:%s212]
    %vm214 = vcmask 1045508
    %v215 = vsel %vm214, %v213, %v210
    %s216 = scalar_lea.vmem %s0, 7
    %s217 = smov 192
    %v218 = vld [vmem:[%s216] ss:$16 sm:%s217]
    %vm219 = vcmask 1047558
    %v220 = vsel %vm219, %v218, %v215
    %221 = vrot.lane.b32.xlu0 %v220, 56
    %v222 = vpop.permute.xlu0 %221
    %vm223 = vcmask 523712
    %224 = vst.msk [vmem:[#allocation0] ss:$8 sm:$0xf] %vm223, %v222
    %225 = vst.msk [vmem:[#allocation0] ss:$8 sm:$0xf0] %vm223, %v222
    %s226 = scalar_lea.vmem %s0, 6
    %s227 = smov 3
    %v228 = vld [vmem:[%s226] ss:$16 sm:%s227]
    %s229 = scalar_lea.vmem %s0, 6
    %s230 = smov 12
    %v231 = vld [vmem:[%s229] ss:$16 sm:%s230]
    %vm232 = vcmask 1043458
    %v233 = vsel %vm232, %v231, %v228
    %s234 = scalar_lea.vmem %s0, 6
    %s235 = smov 48
    %v236 = vld [vmem:[%s234] ss:$16 sm:%s235]
    %vm237 = vcmask 1045508
    %v238 = vsel %vm237, %v236, %v233
    %s239 = scalar_lea.vmem %s0, 6
    %s240 = smov 192
    %v241 = vld [vmem:[%s239] ss:$16 sm:%s240]
    %vm242 = vcmask 1047558
    %v243 = vsel %vm242, %v241, %v238
    %244 = vrot.lane.b32.xlu0 %v243, 48
    %v245 = vpop.permute.xlu0 %244
    %vm246 = vcmask 458112
    %247 = vst.msk [vmem:[#allocation0] ss:$8 sm:$0xf] %vm246, %v245
    %248 = vst.msk [vmem:[#allocation0] ss:$8 sm:$0xf0] %vm246, %v245
    %s249 = scalar_lea.vmem %s0, 5
    %s250 = smov 3
    %v251 = vld [vmem:[%s249] ss:$16 sm:%s250]
    %s252 = scalar_lea.vmem %s0, 5
    %s253 = smov 12
    %v254 = vld [vmem:[%s252] ss:$16 sm:%s253]
    %vm255 = vcmask 1043458
    %v256 = vsel %vm255, %v254, %v251
    %s257 = scalar_lea.vmem %s0, 5
    %s258 = smov 48
    %v259 = vld [vmem:[%s257] ss:$16 sm:%s258]
    %vm260 = vcmask 1045508
    %v261 = vsel %vm260, %v259, %v256
    %s262 = scalar_lea.vmem %s0, 5
    %s263 = smov 192
    %v264 = vld [vmem:[%s262] ss:$16 sm:%s263]
    %vm265 = vcmask 1047558
    %v266 = vsel %vm265, %v264, %v261
    %267 = vrot.lane.b32.xlu0 %v266, 40
    %v268 = vpop.permute.xlu0 %267
    %vm269 = vcmask 392512
    %270 = vst.msk [vmem:[#allocation0] ss:$8 sm:$0xf] %vm269, %v268
    %271 = vst.msk [vmem:[#allocation0] ss:$8 sm:$0xf0] %vm269, %v268
    %s272 = scalar_lea.vmem %s0, 4
    %s273 = smov 3
    %v274 = vld [vmem:[%s272] ss:$16 sm:%s273]
    %s275 = scalar_lea.vmem %s0, 4
    %s276 = smov 12
    %v277 = vld [vmem:[%s275] ss:$16 sm:%s276]
    %vm278 = vcmask 1043458
    %v279 = vsel %vm278, %v277, %v274
    %s280 = scalar_lea.vmem %s0, 4
    %s281 = smov 48
    %v282 = vld [vmem:[%s280] ss:$16 sm:%s281]
    %vm283 = vcmask 1045508
    %v284 = vsel %vm283, %v282, %v279
    %s285 = scalar_lea.vmem %s0, 4
    %s286 = smov 192
    %v287 = vld [vmem:[%s285] ss:$16 sm:%s286]
    %vm288 = vcmask 1047558
    %v289 = vsel %vm288, %v287, %v284
    %290 = vrot.lane.b32.xlu0 %v289, 32
    %v291 = vpop.permute.xlu0 %290
    %vm292 = vcmask 326912
    %293 = vst.msk [vmem:[#allocation0] ss:$8 sm:$0xf] %vm292, %v291
    %294 = vst.msk [vmem:[#allocation0] ss:$8 sm:$0xf0] %vm292, %v291
    %s295 = scalar_lea.vmem %s0, 3
    %s296 = smov 3
    %v297 = vld [vmem:[%s295] ss:$16 sm:%s296]
    %s298 = scalar_lea.vmem %s0, 3
    %s299 = smov 12
    %v300 = vld [vmem:[%s298] ss:$16 sm:%s299]
    %vm301 = vcmask 1043458
    %v302 = vsel %vm301, %v300, %v297
    %s303 = scalar_lea.vmem %s0, 3
    %s304 = smov 48
    %v305 = vld [vmem:[%s303] ss:$16 sm:%s304]
    %vm306 = vcmask 1045508
    %v307 = vsel %vm306, %v305, %v302
    %s308 = scalar_lea.vmem %s0, 3
    %s309 = smov 192
    %v310 = vld [vmem:[%s308] ss:$16 sm:%s309]
    %vm311 = vcmask 1047558
    %v312 = vsel %vm311, %v310, %v307
    %313 = vrot.lane.b32.xlu0 %v312, 24
    %v314 = vpop.permute.xlu0 %313
    %vm315 = vcmask 261312
    %316 = vst.msk [vmem:[#allocation0] ss:$8 sm:$0xf] %vm315, %v314
    %317 = vst.msk [vmem:[#allocation0] ss:$8 sm:$0xf0] %vm315, %v314
    %s318 = scalar_lea.vmem %s0, 2
    %s319 = smov 3
    %v320 = vld [vmem:[%s318] ss:$16 sm:%s319]
    %s321 = scalar_lea.vmem %s0, 2
    %s322 = smov 12
    %v323 = vld [vmem:[%s321] ss:$16 sm:%s322]
    %vm324 = vcmask 1043458
    %v325 = vsel %vm324, %v323, %v320
    %s326 = scalar_lea.vmem %s0, 2
    %s327 = smov 48
    %v328 = vld [vmem:[%s326] ss:$16 sm:%s327]
    %vm329 = vcmask 1045508
    %v330 = vsel %vm329, %v328, %v325
    %s331 = scalar_lea.vmem %s0, 2
    %s332 = smov 192
    %v333 = vld [vmem:[%s331] ss:$16 sm:%s332]
    %vm334 = vcmask 1047558
    %v335 = vsel %vm334, %v333, %v330
    %336 = vrot.lane.b32.xlu0 %v335, 16
    %v337 = vpop.permute.xlu0 %336
    %vm338 = vcmask 195712
    %339 = vst.msk [vmem:[#allocation0] ss:$8 sm:$0xf] %vm338, %v337
    %340 = vst.msk [vmem:[#allocation0] ss:$8 sm:$0xf0] %vm338, %v337
    %s341 = scalar_lea.vmem %s0, 1
    %s342 = smov 3
    %v343 = vld [vmem:[%s341] ss:$16 sm:%s342]
    %s344 = scalar_lea.vmem %s0, 1
    %s345 = smov 12
    %v346 = vld [vmem:[%s344] ss:$16 sm:%s345]
    %vm347 = vcmask 1043458
    %v348 = vsel %vm347, %v346, %v343
    %s349 = scalar_lea.vmem %s0, 1
    %s350 = smov 48
    %v351 = vld [vmem:[%s349] ss:$16 sm:%s350]
    %vm352 = vcmask 1045508
    %v353 = vsel %vm352, %v351, %v348
    %s354 = scalar_lea.vmem %s0, 1
    %s355 = smov 192
    %v356 = vld [vmem:[%s354] ss:$16 sm:%s355]
    %vm357 = vcmask 1047558
    %v358 = vsel %vm357, %v356, %v353
    %359 = vrot.lane.b32.xlu0 %v358, 8
    %v360 = vpop.permute.xlu0 %359
    %vm361 = vcmask 130112
    %362 = vst.msk [vmem:[#allocation0] ss:$8 sm:$0xf] %vm361, %v360
    %363 = vst.msk [vmem:[#allocation0] ss:$8 sm:$0xf0] %vm361, %v360
    %s365 = sshllo.u32 0, 1
    %v367 = vld [vmem:[#allocation0] sm:%s365]
    %s368 = sshllo.u32 0, 1
    %369 = vst [vmem:[%s1] sm:%s368] %v367
    %s370 = scalar_lea.vmem [#allocation0], 8
    %v371 = vld [vmem:[%s370] sm:%s365]
    %s372 = sshllo.u32 0, 1
    %s373 = scalar_lea.vmem %s1, 1
    %374 = vst [vmem:[%s373] sm:%s372] %v371
    %s375 = scalar_lea.vmem [#allocation0], 16
    %v376 = vld [vmem:[%s375] sm:%s365]
    %s377 = sshllo.u32 0, 1
    %s378 = smul.addr 1, 2
    %s379 = scalar_lea.vmem %s1, %s378
    %380 = vst [vmem:[%s379] sm:%s377] %v376
    %s381 = scalar_lea.vmem [#allocation0], 24
    %v382 = vld [vmem:[%s381] sm:%s365]
    %s383 = sshllo.u32 0, 1
    %s384 = smul.addr 1, 3
    %s385 = scalar_lea.vmem %s1, %s384
    %386 = vst [vmem:[%s385] sm:%s383] %v382
    %s387 = scalar_lea.vmem [#allocation0], 32
    %v388 = vld [vmem:[%s387] sm:%s365]
    %s389 = sshllo.u32 0, 1
    %s390 = smul.addr 1, 4
    %s391 = scalar_lea.vmem %s1, %s390
    %392 = vst [vmem:[%s391] sm:%s389] %v388
    %s393 = scalar_lea.vmem [#allocation0], 40
    %v394 = vld [vmem:[%s393] sm:%s365]
    %s395 = sshllo.u32 0, 1
    %s396 = smul.addr 1, 5
    %s397 = scalar_lea.vmem %s1, %s396
    %398 = vst [vmem:[%s397] sm:%s395] %v394
    %s399 = scalar_lea.vmem [#allocation0], 48
    %v400 = vld [vmem:[%s399] sm:%s365]
    %s401 = sshllo.u32 0, 1
    %s402 = smul.addr 1, 6
    %s403 = scalar_lea.vmem %s1, %s402
    %404 = vst [vmem:[%s403] sm:%s401] %v400
    %s405 = scalar_lea.vmem [#allocation0], 56
    %v406 = vld [vmem:[%s405] sm:%s365]
    %s407 = sshllo.u32 0, 1
    %s408 = smul.addr 1, 7
    %s409 = scalar_lea.vmem %s1, %s408
    %410 = vst [vmem:[%s409] sm:%s407] %v406

// kernel: trend_extractor.1
$region0: #{trend_extractor.1}
  #allocation0 [shape = 'u32[]', space=smem, size = 0x4, offset = 0x4, fixed_abs, tag = 'smem constant byte address 0x4 - core index']
  #allocation1 [shape = 'u32[144,128]{1,0:T(1,128)}', space=vmem, size = 0x12000, scoped, tag = 'internal scratch']
  %s0 = inlined_call_operand.vmem [shape: f32[2,64,512], index: 0, kind: input, shape index: {}]
  %s1 = inlined_call_operand.vmem [shape: f32[32,64], index: 1, kind: input, shape index: {}]
  %s2 = inlined_call_operand.vmem [shape: f32[32,64], index: 2, kind: input, shape index: {}]
  %s3 = inlined_call_operand.vmem [shape: f32[1,64], index: 3, kind: input, shape index: {}]
  %s4 = inlined_call_operand.hbm [shape: f32[2,64], index: 4, kind: output, shape index: {}]
  %s5 = sld [smem:[#allocation0]]
  $region26: #{trend_extractor.1} parent=0
    _
  %s7 = ssub.s32 1, %s5
  %s8 = scalar_select 0, %s7, %s5
  $region1: #{trend_extractor.1} parent=0
    #allocation2 [shape = 'u8[1024]{0}', space=vmem, size = 0x400, scoped, tag = 'output window, operand 0, single buffered']
    #allocation3 [shape = 's32[1]{0}', space=sflag, size = 0x4, scoped, tag = 'scoped memory for trend_extractor.1']
    %9 = vsyncpa [#allocation3], 0
    // Predicated region
    $region2: #{trend_extractor.1} parent=1 // pred_check
      _
    $region3: #{trend_extractor.1} parent=1 // pred_check_branch
      %11 = sbr.rel (0) target = $region5
    $region4: #{trend_extractor.1} parent=1 // pred_region
      _
    $region5: #{trend_extractor.1} parent=1 // pred_fallthru
      _
    // Predicated region
    $region6: #{trend_extractor.1} parent=1 // pred_check
      _
    $region7: #{trend_extractor.1} parent=1 // pred_check_branch
      %13 = sbr.rel (0) target = $region9
    $region8: #{trend_extractor.1} parent=1 // pred_region
      _
    $region9: #{trend_extractor.1} parent=1 // pred_fallthru
      _
    // Predicated region
    $region10: #{trend_extractor.1} parent=1 // pred_check
      _
    $region11: #{trend_extractor.1} parent=1 // pred_check_branch
      %15 = sbr.rel (0) target = $region13
    $region12: #{trend_extractor.1} parent=1 // pred_region
      _
    $region13: #{trend_extractor.1} parent=1 // pred_fallthru
      _
    // Predicated region
    $region14: #{trend_extractor.1} parent=1 // pred_check
      _
    $region15: #{trend_extractor.1} parent=1 // pred_check_branch
      %17 = sbr.rel (0) target = $region17
    $region16: #{trend_extractor.1} parent=1 // pred_region
      _
    $region17: #{trend_extractor.1} parent=1 // pred_fallthru
      _
    %v18 = vld [vmem:[%s1] sm:$0xff]
    %v19 = vld [vmem:[%s1 + $0x8] sm:$0xff]
    %v20 = vld [vmem:[%s1 + $0x10] sm:$0xff]
    %v21 = vld [vmem:[%s1 + $0x18] sm:$0xff]
    %v22 = vld [vmem:[%s2] sm:$0xff]
    %v23 = vld [vmem:[%s2 + $0x8] sm:$0xff]
    %v24 = vld [vmem:[%s2 + $0x10] sm:$0xff]
    %v25 = vld [vmem:[%s2 + $0x18] sm:$0xff]
    %v26 = vld [vmem:[%s0] sm:$0xff]
    %v27 = vld [vmem:[%s0 + $0x8] sm:$0xff]
    %v28 = vld [vmem:[%s0 + $0x10] sm:$0xff]
    %v29 = vld [vmem:[%s0 + $0x18] sm:$0xff]
    %v30 = vld [vmem:[%s0 + $0x20] sm:$0xff]
    %v31 = vld [vmem:[%s0 + $0x28] sm:$0xff]
    %v32 = vld [vmem:[%s0 + $0x30] sm:$0xff]
    %v33 = vld [vmem:[%s0 + $0x38] sm:$0xff]
    %v34 = vld [vmem:[%s0 + $0x40] sm:$0xff]
    %v35 = vld [vmem:[%s0 + $0x48] sm:$0xff]
    %v36 = vld [vmem:[%s0 + $0x50] sm:$0xff]
    %v37 = vld [vmem:[%s0 + $0x58] sm:$0xff]
    %v38 = vld [vmem:[%s0 + $0x60] sm:$0xff]
    %v39 = vld [vmem:[%s0 + $0x68] sm:$0xff]
    %v40 = vld [vmem:[%s0 + $0x70] sm:$0xff]
    %v41 = vld [vmem:[%s0 + $0x78] sm:$0xff]
    %v42 = vld [vmem:[%s0 + $0x80] sm:$0xff]
    %v43 = vld [vmem:[%s0 + $0x88] sm:$0xff]
    %v44 = vld [vmem:[%s0 + $0x90] sm:$0xff]
    %v45 = vld [vmem:[%s0 + $0x98] sm:$0xff]
    %v46 = vld [vmem:[%s0 + $0xa0] sm:$0xff]
    %v47 = vld [vmem:[%s0 + $0xa8] sm:$0xff]
    %v48 = vld [vmem:[%s0 + $0xb0] sm:$0xff]
    %v49 = vld [vmem:[%s0 + $0xb8] sm:$0xff]
    %v50 = vld [vmem:[%s0 + $0xc0] sm:$0xff]
    %v51 = vld [vmem:[%s0 + $0xc8] sm:$0xff]
    %v52 = vld [vmem:[%s0 + $0xd0] sm:$0xff]
    %v53 = vld [vmem:[%s0 + $0xd8] sm:$0xff]
    %v54 = vld [vmem:[%s0 + $0xe0] sm:$0xff]
    %v55 = vld [vmem:[%s0 + $0xe8] sm:$0xff]
    %v56 = vld [vmem:[%s0 + $0xf0] sm:$0xff]
    %v57 = vld [vmem:[%s0 + $0xf8] sm:$0xff]
    %vm58 = vcmask 523264
    %v60 = vsel %vm58, %v18, 0
    %v63 = vsel %vm58, %v19, 0
    %v66 = vsel %vm58, %v20, 0
    %v69 = vsel %vm58, %v21, 0
    %71 = vmatprep.subr.mxu0 %v27
    %72 = vmatpush1.msra.mxu0 %v26
    %73 = vmatprep.subr.mxu0 %v31
    %74 = vmatpush1.msra.mxu0 %v30
    %75 = vmatprep.subr.mxu0 %v35
    %76 = vmatpush1.msra.mxu0 %v34
    %77 = vmatprep.subr.mxu0 %v39
    %78 = vmatpush1.msra.mxu0 %v38
    %79 = vmatprep.subr.mxu0 %v43
    %80 = vmatpush1.msra.mxu0 %v42
    %81 = vmatprep.subr.mxu0 %v47
    %82 = vmatpush1.msra.mxu0 %v46
    %83 = vmatprep.subr.mxu0 %v51
    %84 = vmatpush1.msra.mxu0 %v50
    %85 = vmatprep.subr.mxu0 %v55
    %86 = vmatpush1.msra.mxu0 %v54
    %87 = vmatprep.subr.mxu0 0.0
    %88 = vmatpush1.msra.mxu0 0.0
    %89 = vmatprep.subr.mxu0 0.0
    %90 = vmatpush1.msra.mxu0 0.0
    %91 = vmatprep.subr.mxu0 0.0
    %92 = vmatpush1.msra.mxu0 0.0
    %93 = vmatprep.subr.mxu0 0.0
    %94 = vmatpush1.msra.mxu0 0.0
    %95 = vmatprep.subr.mxu0 0.0
    %96 = vmatpush1.msra.mxu0 0.0
    %97 = vmatprep.subr.mxu0 0.0
    %98 = vmatpush1.msra.mxu0 0.0
    %99 = vmatprep.subr.mxu0 0.0
    %100 = vmatpush1.msra.mxu0 0.0
    %101 = vmatprep.subr.mxu0 0.0
    %102 = vmatpush1.msra.mxu0 0.0
    %103 = vmatprep.subr.mxu0 0.0
    %104 = vmatpush1.msra.mxu0 0.0
    %105 = vmatprep.subr.mxu0 0.0
    %106 = vmatpush1.msra.mxu0 0.0
    %107 = vmatprep.subr.mxu0 0.0
    %108 = vmatpush1.msra.mxu0 0.0
    %109 = vmatprep.subr.mxu0 0.0
    %110 = vmatpush1.msra.mxu0 0.0
    %111 = vmatprep.subr.mxu0 0.0
    %112 = vmatpush1.msra.mxu0 0.0
    %113 = vmatprep.subr.mxu0 0.0
    %114 = vmatpush1.msra.mxu0 0.0
    %115 = vmatprep.subr.mxu0 0.0
    %116 = vmatpush1.msra.mxu0 0.0
    %117 = vmatprep.subr.mxu0 0.0
    %118 = vmatpush1.msra.mxu0 0.0
    %119 = vmatprep.subr.mxu0 0.0
    %120 = vmatpush1.msra.mxu0 0.0
    %121 = vmatprep.subr.mxu0 0.0
    %122 = vmatpush1.msra.mxu0 0.0
    %123 = vmatprep.subr.mxu0 0.0
    %124 = vmatpush1.msra.mxu0 0.0
    %125 = vmatprep.subr.mxu0 0.0
    %126 = vmatpush1.msra.mxu0 0.0
    %127 = vmatprep.subr.mxu0 0.0
    %128 = vmatpush1.msra.mxu0 0.0
    %129 = vmatprep.subr.mxu0 0.0
    %130 = vmatpush1.msra.mxu0 0.0
    %131 = vmatprep.subr.mxu0 0.0
    %132 = vmatpush1.msra.mxu0 0.0
    %133 = vmatprep.subr.mxu0 0.0
    %134 = vmatpush1.msra.mxu0 0.0
    %135 = vmatprep.mubr.f32.mxu0 0.0
    %136 = vmatmul.mubr.f32.gmra.mrb[0].mxu0 %v60
    %v137 = vpop.f32.mrb[0].mxu0
    %v138 = vadd.f32 0.0, %v137
    %v139 = vpop.f32.mrb[0].mxu0
    %v140 = vadd.f32 0.0, %v139
    %141 = vmatprep.mubr.f32.mxu0 0.0
    %142 = vmatmul.mubr.f32.gmra.mrb[0].mxu0 %v63
    %v143 = vpop.f32.mrb[0].mxu0
    %v144 = vadd.f32 0.0, %v143
    %v145 = vpop.f32.mrb[0].mxu0
    %v146 = vadd.f32 0.0, %v145
    %147 = vmatprep.mubr.f32.mxu0 0.0
    %148 = vmatmul.mubr.f32.gmra.mrb[0].mxu0 %v66
    %v149 = vpop.f32.mrb[0].mxu0
    %v150 = vadd.f32 0.0, %v149
    %v151 = vpop.f32.mrb[0].mxu0
    %v152 = vadd.f32 0.0, %v151
    %153 = vmatprep.mubr.f32.mxu0 0.0
    %154 = vmatmul.mubr.f32.gmra.mrb[0].mxu0 %v69
    %v155 = vpop.f32.mrb[0].mxu0
    %v156 = vadd.f32 0.0, %v155
    %v157 = vpop.f32.mrb[0].mxu0
    %v158 = vadd.f32 0.0, %v157
    %159 = vdwg.mxu0
    %160 = vmatprep.subr.mxu0 %v29
    %161 = vmatpush1.msra.mxu0 %v28
    %162 = vmatprep.subr.mxu0 %v33
    %163 = vmatpush1.msra.mxu0 %v32
    %164 = vmatprep.subr.mxu0 %v37
    %165 = vmatpush1.msra.mxu0 %v36
    %166 = vmatprep.subr.mxu0 %v41
    %167 = vmatpush1.msra.mxu0 %v40
    %168 = vmatprep.subr.mxu0 %v45
    %169 = vmatpush1.msra.mxu0 %v44
    %170 = vmatprep.subr.mxu0 %v49
    %171 = vmatpush1.msra.mxu0 %v48
    %172 = vmatprep.subr.mxu0 %v53
    %173 = vmatpush1.msra.mxu0 %v52
    %174 = vmatprep.subr.mxu0 %v57
    %175 = vmatpush1.msra.mxu0 %v56
    %176 = vmatprep.subr.mxu0 0.0
    %177 = vmatpush1.msra.mxu0 0.0
    %178 = vmatprep.subr.mxu0 0.0
    %179 = vmatpush1.msra.mxu0 0.0
    %180 = vmatprep.subr.mxu0 0.0
    %181 = vmatpush1.msra.mxu0 0.0
    %182 = vmatprep.subr.mxu0 0.0
    %183 = vmatpush1.msra.mxu0 0.0
    %184 = vmatprep.subr.mxu0 0.0
    %185 = vmatpush1.msra.mxu0 0.0
    %186 = vmatprep.subr.mxu0 0.0
    %187 = vmatpush1.msra.mxu0 0.0
    %188 = vmatprep.subr.mxu0 0.0
    %189 = vmatpush1.msra.mxu0 0.0
    %190 = vmatprep.subr.mxu0 0.0
    %191 = vmatpush1.msra.mxu0 0.0
    %192 = vmatprep.subr.mxu0 0.0
    %193 = vmatpush1.msra.mxu0 0.0
    %194 = vmatprep.subr.mxu0 0.0
    %195 = vmatpush1.msra.mxu0 0.0
    %196 = vmatprep.subr.mxu0 0.0
    %197 = vmatpush1.msra.mxu0 0.0
    %198 = vmatprep.subr.mxu0 0.0
    %199 = vmatpush1.msra.mxu0 0.0
    %200 = vmatprep.subr.mxu0 0.0
    %201 = vmatpush1.msra.mxu0 0.0
    %202 = vmatprep.subr.mxu0 0.0
    %203 = vmatpush1.msra.mxu0 0.0
    %204 = vmatprep.subr.mxu0 0.0
    %205 = vmatpush1.msra.mxu0 0.0
    %206 = vmatprep.subr.mxu0 0.0
    %207 = vmatpush1.msra.mxu0 0.0
    %208 = vmatprep.subr.mxu0 0.0
    %209 = vmatpush1.msra.mxu0 0.0
    %210 = vmatprep.subr.mxu0 0.0
    %211 = vmatpush1.msra.mxu0 0.0
    %212 = vmatprep.subr.mxu0 0.0
    %213 = vmatpush1.msra.mxu0 0.0
    %214 = vmatprep.subr.mxu0 0.0
    %215 = vmatpush1.msra.mxu0 0.0
    %216 = vmatprep.subr.mxu0 0.0
    %217 = vmatpush1.msra.mxu0 0.0
    %218 = vmatprep.subr.mxu0 0.0
    %219 = vmatpush1.msra.mxu0 0.0
    %220 = vmatprep.subr.mxu0 0.0
    %221 = vmatpush1.msra.mxu0 0.0
    %222 = vmatprep.subr.mxu0 0.0
    %223 = vmatpush1.msra.mxu0 0.0
    %224 = vmatprep.mubr.f32.mxu0 0.0
    %225 = vmatmul.mubr.f32.gmra.mrb[0].mxu0 %v60
    %v226 = vpop.f32.mrb[0].mxu0
    %v227 = vadd.f32 0.0, %v226
    %v228 = vpop.f32.mrb[0].mxu0
    %v229 = vadd.f32 0.0, %v228
    %230 = vmatprep.mubr.f32.mxu0 0.0
    %231 = vmatmul.mubr.f32.gmra.mrb[0].mxu0 %v63
    %v232 = vpop.f32.mrb[0].mxu0
    %v233 = vadd.f32 0.0, %v232
    %v234 = vpop.f32.mrb[0].mxu0
    %v235 = vadd.f32 0.0, %v234
    %236 = vmatprep.mubr.f32.mxu0 0.0
    %237 = vmatmul.mubr.f32.gmra.mrb[0].mxu0 %v66
    %v238 = vpop.f32.mrb[0].mxu0
    %v239 = vadd.f32 0.0, %v238
    %v240 = vpop.f32.mrb[0].mxu0
    %v241 = vadd.f32 0.0, %v240
    %242 = vmatprep.mubr.f32.mxu0 0.0
    %243 = vmatmul.mubr.f32.gmra.mrb[0].mxu0 %v69
    %v244 = vpop.f32.mrb[0].mxu0
    %v245 = vadd.f32 0.0, %v244
    %v246 = vpop.f32.mrb[0].mxu0
    %v247 = vadd.f32 0.0, %v246
    %248 = vdwg.mxu0
    %v249 = vmax.f32 %v138, 0.0
    %v250 = vmax.f32 %v140, 0.0
    %v251 = vmax.f32 %v227, 0.0
    %v252 = vmax.f32 %v229, 0.0
    %v253 = vmax.f32 %v144, 0.0
    %v254 = vmax.f32 %v146, 0.0
    %v255 = vmax.f32 %v233, 0.0
    %v256 = vmax.f32 %v235, 0.0
    %v257 = vmax.f32 %v150, 0.0
    %v258 = vmax.f32 %v152, 0.0
    %v259 = vmax.f32 %v239, 0.0
    %v260 = vmax.f32 %v241, 0.0
    %v261 = vmax.f32 %v156, 0.0
    %v262 = vmax.f32 %v158, 0.0
    %v263 = vmax.f32 %v245, 0.0
    %v264 = vmax.f32 %v247, 0.0
    %v265 = vadd.f32 %v249, %v250
    %v266 = vadd.f32 %v265, %v251
    %v267 = vadd.f32 %v266, %v252
    %268 = vadd.xlane.f32.xlu0 %v267
    %v269 = vpop.xlane.xlu0 %268
    %v270 = vadd.f32 %v253, %v254
    %v271 = vadd.f32 %v270, %v255
    %v272 = vadd.f32 %v271, %v256
    %273 = vadd.xlane.f32.xlu0 %v272
    %v274 = vpop.xlane.xlu0 %273
    %v275 = vadd.f32 %v257, %v258
    %v276 = vadd.f32 %v275, %v259
    %v277 = vadd.f32 %v276, %v260
    %278 = vadd.xlane.f32.xlu0 %v277
    %v279 = vpop.xlane.xlu0 %278
    %v280 = vadd.f32 %v261, %v262
    %v281 = vadd.f32 %v280, %v263
    %v282 = vadd.f32 %v281, %v264
    %283 = vadd.xlane.f32.xlu0 %v282
    %v284 = vpop.xlane.xlu0 %283
    %v285 = vmul.f32 %v269, 0.001953125
    %v286 = vmul.f32 %v274, 0.001953125
    %v287 = vmul.f32 %v279, 0.001953125
    %v288 = vmul.f32 %v284, 0.001953125
    %v289 = vmul.f32 %v285, %v22
    %v290 = vmul.f32 %v286, %v23
    %v291 = vmul.f32 %v287, %v24
    %v292 = vmul.f32 %v288, %v25
    %v293 = vsel %vm58, %v289, 0.0
    %v294 = vsel %vm58, %v290, 0.0
    %v295 = vadd.f32 %v293, %v294
    %v296 = vsel %vm58, %v291, 0.0
    %v297 = vadd.f32 %v295, %v296
    %v298 = vsel %vm58, %v292, 0.0
    %v299 = vadd.f32 %v297, %v298
    %v300 = vrot.slane %v299, 4
    %v301 = vadd.f32 %v299, %v300
    %v302 = vrot.slane %v301, 2
    %v303 = vadd.f32 %v301, %v302
    %v304 = vrot.slane %v303, 1
    %v305 = vadd.f32 %v303, %v304
    %s306 = scalar_lea.vmem %s0, 256
    %v307 = vld [vmem:[%s306] sm:$0xff]
    %v308 = vld [vmem:[%s306 + $0x8] sm:$0xff]
    %v309 = vld [vmem:[%s306 + $0x10] sm:$0xff]
    %v310 = vld [vmem:[%s306 + $0x18] sm:$0xff]
    %v311 = vld [vmem:[%s306 + $0x20] sm:$0xff]
    %v312 = vld [vmem:[%s306 + $0x28] sm:$0xff]
    %v313 = vld [vmem:[%s306 + $0x30] sm:$0xff]
    %v314 = vld [vmem:[%s306 + $0x38] sm:$0xff]
    %v315 = vld [vmem:[%s306 + $0x40] sm:$0xff]
    %v316 = vld [vmem:[%s306 + $0x48] sm:$0xff]
    %v317 = vld [vmem:[%s306 + $0x50] sm:$0xff]
    %v318 = vld [vmem:[%s306 + $0x58] sm:$0xff]
    %v319 = vld [vmem:[%s306 + $0x60] sm:$0xff]
    %v320 = vld [vmem:[%s306 + $0x68] sm:$0xff]
    %v321 = vld [vmem:[%s306 + $0x70] sm:$0xff]
    %v322 = vld [vmem:[%s306 + $0x78] sm:$0xff]
    %v323 = vld [vmem:[%s306 + $0x80] sm:$0xff]
    %v324 = vld [vmem:[%s306 + $0x88] sm:$0xff]
    %v325 = vld [vmem:[%s306 + $0x90] sm:$0xff]
    %v326 = vld [vmem:[%s306 + $0x98] sm:$0xff]
    %v327 = vld [vmem:[%s306 + $0xa0] sm:$0xff]
    %v328 = vld [vmem:[%s306 + $0xa8] sm:$0xff]
    %v329 = vld [vmem:[%s306 + $0xb0] sm:$0xff]
    %v330 = vld [vmem:[%s306 + $0xb8] sm:$0xff]
    %v331 = vld [vmem:[%s306 + $0xc0] sm:$0xff]
    %v332 = vld [vmem:[%s306 + $0xc8] sm:$0xff]
    %v333 = vld [vmem:[%s306 + $0xd0] sm:$0xff]
    %v334 = vld [vmem:[%s306 + $0xd8] sm:$0xff]
    %v335 = vld [vmem:[%s306 + $0xe0] sm:$0xff]
    %v336 = vld [vmem:[%s306 + $0xe8] sm:$0xff]
    %v337 = vld [vmem:[%s306 + $0xf0] sm:$0xff]
    %v338 = vld [vmem:[%s306 + $0xf8] sm:$0xff]
    %339 = vmatprep.subr.mxu0 %v308
    %340 = vmatpush1.msra.mxu0 %v307
    %341 = vmatprep.subr.mxu0 %v312
    %342 = vmatpush1.msra.mxu0 %v311
    %343 = vmatprep.subr.mxu0 %v316
    %344 = vmatpush1.msra.mxu0 %v315
    %345 = vmatprep.subr.mxu0 %v320
    %346 = vmatpush1.msra.mxu0 %v319
    %347 = vmatprep.subr.mxu0 %v324
    %348 = vmatpush1.msra.mxu0 %v323
    %349 = vmatprep.subr.mxu0 %v328
    %350 = vmatpush1.msra.mxu0 %v327
    %351 = vmatprep.subr.mxu0 %v332
    %352 = vmatpush1.msra.mxu0 %v331
    %353 = vmatprep.subr.mxu0 %v336
    %354 = vmatpush1.msra.mxu0 %v335
    %355 = vmatprep.subr.mxu0 0.0
    %356 = vmatpush1.msra.mxu0 0.0
    %357 = vmatprep.subr.mxu0 0.0
    %358 = vmatpush1.msra.mxu0 0.0
    %359 = vmatprep.subr.mxu0 0.0
    %360 = vmatpush1.msra.mxu0 0.0
    %361 = vmatprep.subr.mxu0 0.0
    %362 = vmatpush1.msra.mxu0 0.0
    %363 = vmatprep.subr.mxu0 0.0
    %364 = vmatpush1.msra.mxu0 0.0
    %365 = vmatprep.subr.mxu0 0.0
    %366 = vmatpush1.msra.mxu0 0.0
    %367 = vmatprep.subr.mxu0 0.0
    %368 = vmatpush1.msra.mxu0 0.0
    %369 = vmatprep.subr.mxu0 0.0
    %370 = vmatpush1.msra.mxu0 0.0
    %371 = vmatprep.subr.mxu0 0.0
    %372 = vmatpush1.msra.mxu0 0.0
    %373 = vmatprep.subr.mxu0 0.0
    %374 = vmatpush1.msra.mxu0 0.0
    %375 = vmatprep.subr.mxu0 0.0
    %376 = vmatpush1.msra.mxu0 0.0
    %377 = vmatprep.subr.mxu0 0.0
    %378 = vmatpush1.msra.mxu0 0.0
    %379 = vmatprep.subr.mxu0 0.0
    %380 = vmatpush1.msra.mxu0 0.0
    %381 = vmatprep.subr.mxu0 0.0
    %382 = vmatpush1.msra.mxu0 0.0
    %383 = vmatprep.subr.mxu0 0.0
    %384 = vmatpush1.msra.mxu0 0.0
    %385 = vmatprep.subr.mxu0 0.0
    %386 = vmatpush1.msra.mxu0 0.0
    %387 = vmatprep.subr.mxu0 0.0
    %388 = vmatpush1.msra.mxu0 0.0
    %389 = vmatprep.subr.mxu0 0.0
    %390 = vmatpush1.msra.mxu0 0.0
    %391 = vmatprep.subr.mxu0 0.0
    %392 = vmatpush1.msra.mxu0 0.0
    %393 = vmatprep.subr.mxu0 0.0
    %394 = vmatpush1.msra.mxu0 0.0
    %395 = vmatprep.subr.mxu0 0.0
    %396 = vmatpush1.msra.mxu0 0.0
    %397 = vmatprep.subr.mxu0 0.0
    %398 = vmatpush1.msra.mxu0 0.0
    %399 = vmatprep.subr.mxu0 0.0
    %400 = vmatpush1.msra.mxu0 0.0
    %401 = vmatprep.subr.mxu0 0.0
    %402 = vmatpush1.msra.mxu0 0.0
    %403 = vmatprep.mubr.f32.mxu0 0.0
    %404 = vmatmul.mubr.f32.gmra.mrb[0].mxu0 %v60
    %v405 = vpop.f32.mrb[0].mxu0
    %v406 = vadd.f32 0.0, %v405
    %v407 = vpop.f32.mrb[0].mxu0
    %v408 = vadd.f32 0.0, %v407
    %409 = vmatprep.mubr.f32.mxu0 0.0
    %410 = vmatmul.mubr.f32.gmra.mrb[0].mxu0 %v63
    %v411 = vpop.f32.mrb[0].mxu0
    %v412 = vadd.f32 0.0, %v411
    %v413 = vpop.f32.mrb[0].mxu0
    %v414 = vadd.f32 0.0, %v413
    %415 = vmatprep.mubr.f32.mxu0 0.0
    %416 = vmatmul.mubr.f32.gmra.mrb[0].mxu0 %v66
    %v417 = vpop.f32.mrb[0].mxu0
    %v418 = vadd.f32 0.0, %v417
    %v419 = vpop.f32.mrb[0].mxu0
    %v420 = vadd.f32 0.0, %v419
    %421 = vmatprep.mubr.f32.mxu0 0.0
    %422 = vmatmul.mubr.f32.gmra.mrb[0].mxu0 %v69
    %v423 = vpop.f32.mrb[0].mxu0
    %v424 = vadd.f32 0.0, %v423
    %v425 = vpop.f32.mrb[0].mxu0
    %v426 = vadd.f32 0.0, %v425
    %427 = vdwg.mxu0
    %428 = vmatprep.subr.mxu0 %v310
    %429 = vmatpush1.msra.mxu0 %v309
    %430 = vmatprep.subr.mxu0 %v314
    %431 = vmatpush1.msra.mxu0 %v313
    %432 = vmatprep.subr.mxu0 %v318
    %433 = vmatpush1.msra.mxu0 %v317
    %434 = vmatprep.subr.mxu0 %v322
    %435 = vmatpush1.msra.mxu0 %v321
    %436 = vmatprep.subr.mxu0 %v326
    %437 = vmatpush1.msra.mxu0 %v325
    %438 = vmatprep.subr.mxu0 %v330
    %439 = vmatpush1.msra.mxu0 %v329
    %440 = vmatprep.subr.mxu0 %v334
    %441 = vmatpush1.msra.mxu0 %v333
    %442 = vmatprep.subr.mxu0 %v338
    %443 = vmatpush1.msra.mxu0 %v337
    %444 = vmatprep.subr.mxu0 0.0
    %445 = vmatpush1.msra.mxu0 0.0
    %446 = vmatprep.subr.mxu0 0.0
    %447 = vmatpush1.msra.mxu0 0.0
    %448 = vmatprep.subr.mxu0 0.0
    %449 = vmatpush1.msra.mxu0 0.0
    %450 = vmatprep.subr.mxu0 0.0
    %451 = vmatpush1.msra.mxu0 0.0
    %452 = vmatprep.subr.mxu0 0.0
    %453 = vmatpush1.msra.mxu0 0.0
    %454 = vmatprep.subr.mxu0 0.0
    %455 = vmatpush1.msra.mxu0 0.0
    %456 = vmatprep.subr.mxu0 0.0
    %457 = vmatpush1.msra.mxu0 0.0
    %458 = vmatprep.subr.mxu0 0.0
    %459 = vmatpush1.msra.mxu0 0.0
    %460 = vmatprep.subr.mxu0 0.0
    %461 = vmatpush1.msra.mxu0 0.0
    %462 = vmatprep.subr.mxu0 0.0
    %463 = vmatpush1.msra.mxu0 0.0
    %464 = vmatprep.subr.mxu0 0.0
    %465 = vmatpush1.msra.mxu0 0.0
    %466 = vmatprep.subr.mxu0 0.0
    %467 = vmatpush1.msra.mxu0 0.0
    %468 = vmatprep.subr.mxu0 0.0
    %469 = vmatpush1.msra.mxu0 0.0
    %470 = vmatprep.subr.mxu0 0.0
    %471 = vmatpush1.msra.mxu0 0.0
    %472 = vmatprep.subr.mxu0 0.0
    %473 = vmatpush1.msra.mxu0 0.0
    %474 = vmatprep.subr.mxu0 0.0
    %475 = vmatpush1.msra.mxu0 0.0
    %476 = vmatprep.subr.mxu0 0.0
    %477 = vmatpush1.msra.mxu0 0.0
    %478 = vmatprep.subr.mxu0 0.0
    %479 = vmatpush1.msra.mxu0 0.0
    %480 = vmatprep.subr.mxu0 0.0
    %481 = vmatpush1.msra.mxu0 0.0
    %482 = vmatprep.subr.mxu0 0.0
    %483 = vmatpush1.msra.mxu0 0.0
    %484 = vmatprep.subr.mxu0 0.0
    %485 = vmatpush1.msra.mxu0 0.0
    %486 = vmatprep.subr.mxu0 0.0
    %487 = vmatpush1.msra.mxu0 0.0
    %488 = vmatprep.subr.mxu0 0.0
    %489 = vmatpush1.msra.mxu0 0.0
    %490 = vmatprep.subr.mxu0 0.0
    %491 = vmatpush1.msra.mxu0 0.0
    %492 = vmatprep.mubr.f32.mxu0 0.0
    %493 = vmatmul.mubr.f32.gmra.mrb[0].mxu0 %v60
    %v494 = vpop.f32.mrb[0].mxu0
    %v495 = vadd.f32 0.0, %v494
    %v496 = vpop.f32.mrb[0].mxu0
    %v497 = vadd.f32 0.0, %v496
    %498 = vmatprep.mubr.f32.mxu0 0.0
    %499 = vmatmul.mubr.f32.gmra.mrb[0].mxu0 %v63
    %v500 = vpop.f32.mrb[0].mxu0
    %v501 = vadd.f32 0.0, %v500
    %v502 = vpop.f32.mrb[0].mxu0
    %v503 = vadd.f32 0.0, %v502
    %504 = vmatprep.mubr.f32.mxu0 0.0
    %505 = vmatmul.mubr.f32.gmra.mrb[0].mxu0 %v66
    %v506 = vpop.f32.mrb[0].mxu0
    %v507 = vadd.f32 0.0, %v506
    %v508 = vpop.f32.mrb[0].mxu0
    %v509 = vadd.f32 0.0, %v508
    %510 = vmatprep.mubr.f32.mxu0 0.0
    %511 = vmatmul.mubr.f32.gmra.mrb[0].mxu0 %v69
    %v512 = vpop.f32.mrb[0].mxu0
    %v513 = vadd.f32 0.0, %v512
    %v514 = vpop.f32.mrb[0].mxu0
    %v515 = vadd.f32 0.0, %v514
    %516 = vdwg.mxu0
    %v517 = vmax.f32 %v406, 0.0
    %v518 = vmax.f32 %v408, 0.0
    %v519 = vmax.f32 %v495, 0.0
    %v520 = vmax.f32 %v497, 0.0
    %v521 = vmax.f32 %v412, 0.0
    %v522 = vmax.f32 %v414, 0.0
    %v523 = vmax.f32 %v501, 0.0
    %v524 = vmax.f32 %v503, 0.0
    %v525 = vmax.f32 %v418, 0.0
    %v526 = vmax.f32 %v420, 0.0
    %v527 = vmax.f32 %v507, 0.0
    %v528 = vmax.f32 %v509, 0.0
    %v529 = vmax.f32 %v424, 0.0
    %v530 = vmax.f32 %v426, 0.0
    %v531 = vmax.f32 %v513, 0.0
    %v532 = vmax.f32 %v515, 0.0
    %v533 = vadd.f32 %v517, %v518
    %v534 = vadd.f32 %v533, %v519
    %v535 = vadd.f32 %v534, %v520
    %536 = vadd.xlane.f32.xlu0 %v535
    %v537 = vpop.xlane.xlu0 %536
    %v538 = vadd.f32 %v521, %v522
    %v539 = vadd.f32 %v538, %v523
    %v540 = vadd.f32 %v539, %v524
    %541 = vadd.xlane.f32.xlu0 %v540
    %v542 = vpop.xlane.xlu0 %541
    %v543 = vadd.f32 %v525, %v526
    %v544 = vadd.f32 %v543, %v527
    %v545 = vadd.f32 %v544, %v528
    %546 = vadd.xlane.f32.xlu0 %v545
    %v547 = vpop.xlane.xlu0 %546
    %v548 = vadd.f32 %v529, %v530
    %v549 = vadd.f32 %v548, %v531
    %v550 = vadd.f32 %v549, %v532
    %551 = vadd.xlane.f32.xlu0 %v550
    %v552 = vpop.xlane.xlu0 %551
    %v553 = vmul.f32 %v537, 0.001953125
    %v554 = vmul.f32 %v542, 0.001953125
    %v555 = vmul.f32 %v547, 0.001953125
    %v556 = vmul.f32 %v552, 0.001953125
    %v557 = vmul.f32 %v553, %v22
    %v558 = vmul.f32 %v554, %v23
    %v559 = vmul.f32 %v555, %v24
    %v560 = vmul.f32 %v556, %v25
    %v561 = vsel %vm58, %v557, 0.0
    %v562 = vsel %vm58, %v558, 0.0
    %v563 = vadd.f32 %v561, %v562
    %v564 = vsel %vm58, %v559, 0.0
    %v565 = vadd.f32 %v563, %v564
    %v566 = vsel %vm58, %v560, 0.0
    %v567 = vadd.f32 %v565, %v566
    %v568 = vrot.slane %v567, 4
    %v569 = vadd.f32 %v567, %v568
    %v570 = vrot.slane %v569, 2
    %v571 = vadd.f32 %v569, %v570
    %v572 = vrot.slane %v571, 1
    %v573 = vadd.f32 %v571, %v572
    %vm574 = vcmask 1040384
    %v575 = vsel %vm574, %v305, %v573
    %v576 = vld [vmem:[%s3] sm:$0x1]
    %v578 = vlaneseq
    %v579 = vshrl.u32 %v578, 7
    %v580 = vsub.s32 0, %v579
    %v581 = vrot.slane %v576, %v580
    %v583 = vadd.f32 %v575, %v581
    %vm584 = vcmask 517120
    %585 = vst.msk [vmem:[#allocation2] sm:$0x3] %vm584, %v583
    // Predicated region
    $region18: #{trend_extractor.1} parent=1 // pred_check
      _
    $region19: #{trend_extractor.1} parent=1 // pred_check_branch
      %587 = sbr.rel (0) target = $region21
    $region20: #{trend_extractor.1} parent=1 // pred_region
      %s589 = ssub.s32 32, 32
      %590 = vsyncadd [#allocation3], %s589
      %s592 = sshll.u32 [#allocation2], 4
      %s593 = int_to_ptr.vmem [resolvable:$true] %s592
      %595 = dma.vmem_to_hbm [thread:$0]  %s593, 32, %s4, [#allocation3]
    $region21: #{trend_extractor.1} parent=1 // pred_fallthru
      _
    // Predicated region
    $region22: #{trend_extractor.1} parent=1 // pred_check
      _
    $region23: #{trend_extractor.1} parent=1 // pred_check_branch
      %597 = sbr.rel (0) target = $region25
    $region24: #{trend_extractor.1} parent=1 // pred_region
      %598 = dma.done [#allocation3], 32
    $region25: #{trend_extractor.1} parent=1 // pred_fallthru
      _
    %599 = vsyncpa [#allocation3], 1

</llo_original>
